<compile_context>
chip_gen: v6e
topology: v6e:2x2x1
jax: 0.10.0
libtpu: 0.0.40
codegen_flags: <defaults>
</compile_context>

<pallas_src>
import jax
import jax.numpy as jnp
from jax.experimental import pallas as pl
from jax.experimental.pallas import tpu as pltpu

_LANE = 128
_MAX_LANE_WIDTH = 8192


def _copy_kernel(x_ref, o_ref):
    # Pure pass-through copy of the current lane-dense tile.
    o_ref[...] = x_ref[...]


def _per_generation_tile_bytes():
    """Return (tile_bytes, vmem_limit_bytes) tuned per TPU generation."""
    try:
        kind = jax.devices()[0].device_kind.lower()
    except Exception:
        kind = ""
    if (not kind) or ("v5" in kind) or ("v4" in kind):
        # v5e: 16 MiB default scoped VMEM -> 2 bufs x (in+out) x 2 MiB = 8 MiB.
        return 2 * 1024 * 1024, None
    # v6e / v7x: 8 MiB tiles amortize the ~0.35 us per-grid-step overhead.
    # Live VMEM = 2 x 2 x 8 MiB = 32 MiB; raise the scoped limit with headroom
    # (stays well under v7x's 64 MiB physical VMEM).
    return 8 * 1024 * 1024, 48 * 1024 * 1024


def _lane_width(total):
    """Widest power-of-two lane width in [128, 8192] dividing `total`."""
    w = _MAX_LANE_WIDTH
    while w >= _LANE:
        if total % w == 0:
            return w
        w //= 2
    return None


def _materializing_copy(x):
    """Bit-exact Pallas HBM->HBM copy of x with lane-dense tiling."""
    total = x.size
    if total == 0:
        return x

    width = _lane_width(total)
    if width is None:
        # Element count not a multiple of 128: single full-array block
        # (full-extent blocks are exempt from the (8,128) divisibility rule).
        x2 = x.reshape(1, total)
        out2 = pl.pallas_call(
            _copy_kernel,
            out_shape=jax.ShapeDtypeStruct(x2.shape, x.dtype),
            in_specs=[pl.BlockSpec(x2.shape, lambda: (0, 0))],
            out_specs=pl.BlockSpec(x2.shape, lambda: (0, 0)),
        )(x2)
        return out2.reshape(x.shape)

    rows = total // width
    x2 = x.reshape(rows, width)

    tile_bytes, vmem_limit = _per_generation_tile_bytes()
    itemsize = x.dtype.itemsize
    # Tile rows as a multiple of 32 so sub-32-bit dtypes keep native packed
    # sublane tiling (bf16 packs (16,128), int8/fp8 pack (32,128)).
    max_tile_rows = max(32, (tile_bytes // (width * itemsize)) // 32 * 32)

    if rows <= max_tile_rows:
        # Whole array fits one block: no grid loop, single DMA in / DMA out.
        out2 = pl.pallas_call(
            _copy_kernel,
            out_shape=jax.ShapeDtypeStruct((rows, width), x.dtype),
            in_specs=[pl.BlockSpec((rows, width), lambda: (0, 0))],
            out_specs=pl.BlockSpec((rows, width), lambda: (0, 0)),
        )(x2)
        return out2.reshape(x.shape)

    # Large tensor: 1-D grid over row chunks; independent blocks -> "parallel"
    # (shards across the two TensorCores on v7x).
    tile_r = max_tile_rows
    grid = (pl.cdiv(rows, tile_r),)
    cp_kwargs = {"dimension_semantics": ("parallel",)}
    if vmem_limit is not None:
        cp_kwargs["vmem_limit_bytes"] = vmem_limit
    out2 = pl.pallas_call(
        _copy_kernel,
        out_shape=jax.ShapeDtypeStruct((rows, width), x.dtype),
        grid=grid,
        in_specs=[pl.BlockSpec((tile_r, width), lambda i: (i, 0))],
        out_specs=pl.BlockSpec((tile_r, width), lambda i: (i, 0)),
        compiler_params=pltpu.CompilerParams(**cp_kwargs),
    )(x2)
    return out2.reshape(x.shape)


def print_layer(x, label="debug", materialize=False):
    """Pallas equivalent of the PyTorch `Print` module's forward pass.

    Default (`materialize=False`): host print + identity return — no HBM
    traffic, no kernel launch (the recommended path on v5e/v6e/v7x).
    `materialize=True`: additionally runs a Pallas copy kernel to produce a
    fresh materialized buffer.
    """
    print('label: ', label, ', shape: ', tuple(x.shape))
    if not materialize:
        return x
    return _materializing_copy(x)


if __name__ == "__main__":
    key = jax.random.PRNGKey(0)
    # Small NCHW input consistent with a conv-net debug layer.
    x = jax.random.normal(key, (2, 4, 16, 16), dtype=jnp.float32)

    # Default (recommended) path: pure identity after the host print.
    y_fast = print_layer(x, label="after_conv1")
    assert y_fast is x

    # Explicit materializing path exercises the Pallas copy kernel.
    y = print_layer(x, label="after_conv1_materialized", materialize=True)
    y = jax.block_until_ready(y)

    # Verify identity semantics.
    assert y.shape == x.shape
    assert y.dtype == x.dtype
    assert bool(jnp.all(y == x))

    print("KERNEL_OK")
</pallas_src>

<mosaic_0001>
module attributes {stable_mosaic.version = 11 : i64} {
  func.func @_copy_kernel(%arg0: memref<1x2048xf32, #tpu.memory_space<vmem>>, %arg1: memref<1x2048xf32, #tpu.memory_space<vmem>>) attributes {dimension_semantics = [], scalar_prefetch = 0 : i64, scratch_operands = 0 : i64, tpu.core_type = #tpu.core_type<tc>} {
    %c0 = arith.constant 0 : index
    %c0_0 = arith.constant 0 : index
    %0 = vector.load %arg0[%c0, %c0_0] : memref<1x2048xf32, #tpu.memory_space<vmem>>, vector<1x2048xf32>
    %c0_1 = arith.constant 0 : index
    %c0_2 = arith.constant 0 : index
    %1 = vector.load %arg1[%c0_1, %c0_2] : memref<1x2048xf32, #tpu.memory_space<vmem>>, vector<1x2048xf32>
    tpu.vector_store %arg1[%c0_1, %c0_2], %0 {strides = array<i32>} : memref<1x2048xf32, #tpu.memory_space<vmem>>, vector<1x2048xf32>,
    return
  }
}

</mosaic_0001>

<llo_original>
// kernel: tpu_custom_call.1
$region0: #{tpu_custom_call.1}
  #allocation0 [shape = 'u32[]', space=smem, size = 0x4, offset = 0x4, fixed_abs, tag = 'smem constant byte address 0x4 - core index']
  #allocation1 [shape = 'u32[144,128]{1,0:T(1,128)}', space=vmem, size = 0x12000, scoped, tag = 'internal scratch']
  %s0 = inlined_call_operand.hbm [shape: f32[1,2048], index: 0, kind: input, shape index: {}]
  %s1 = inlined_call_operand.hbm [shape: f32[1,2048], index: 1, kind: output, shape index: {}]
  %s2 = sld [smem:[#allocation0]]
  $region18: #{tpu_custom_call.1} parent=0
    _
  %s4 = ssub.s32 1, %s2
  %s5 = scalar_select 0, %s4, %s2
  $region1: #{tpu_custom_call.1} parent=0
    #allocation2 [shape = 'u8[8192]{0}', space=vmem, size = 0x2000, scoped, tag = 'input window, operand 0, single buffered']
    #allocation3 [shape = 's32[1]{0}', space=sflag, size = 0x4, scoped, tag = 'scoped memory for tpu_custom_call.1']
    #allocation4 [shape = 's32[1]{0}', space=sflag, size = 0x4, scoped, tag = 'scoped memory for tpu_custom_call.1']
    #allocation5 [shape = 'u8[8192]{0}', space=vmem, size = 0x2000, scoped, tag = 'output window, operand 0, single buffered']
    %6 = vsyncpa [#allocation3], 0
    %7 = vsyncpa [#allocation4], 0
    // Predicated region
    $region2: #{tpu_custom_call.1} parent=1 // pred_check
      _
    $region3: #{tpu_custom_call.1} parent=1 // pred_check_branch
      %9 = sbr.rel (0) target = $region5
    $region4: #{tpu_custom_call.1} parent=1 // pred_region
      %s11 = ssub.s32 256, 256
      %12 = vsyncadd [#allocation3], %s11
      %s14 = sshll.u32 [#allocation2], 4
      %s15 = int_to_ptr.vmem [resolvable:$true] %s14
      %17 = dma.hbm_to_vmem [thread:$0]  %s0, 256, %s15, [#allocation3]
    $region5: #{tpu_custom_call.1} parent=1 // pred_fallthru
      _
    // Predicated region
    $region6: #{tpu_custom_call.1} parent=1 // pred_check
      _
    $region7: #{tpu_custom_call.1} parent=1 // pred_check_branch
      %19 = sbr.rel (0) target = $region9
    $region8: #{tpu_custom_call.1} parent=1 // pred_region
      %20 = dma.done [#allocation3], 256
    $region9: #{tpu_custom_call.1} parent=1 // pred_fallthru
      _
    %v21 = vld [vmem:[#allocation2] sm:$0xff]
    %v22 = vld [vmem:[#allocation2 + $0x8] sm:$0xff]
    %23 = vst [vmem:[#allocation5] sm:$0xff] %v21
    %24 = vst [vmem:[#allocation5 + $0x8] sm:$0xff] %v22
    // Predicated region
    $region10: #{tpu_custom_call.1} parent=1 // pred_check
      _
    $region11: #{tpu_custom_call.1} parent=1 // pred_check_branch
      %26 = sbr.rel (0) target = $region13
    $region12: #{tpu_custom_call.1} parent=1 // pred_region
      %s28 = ssub.s32 256, 256
      %29 = vsyncadd [#allocation4], %s28
      %s31 = sshll.u32 [#allocation5], 4
      %s32 = int_to_ptr.vmem [resolvable:$true] %s31
      %34 = dma.vmem_to_hbm [thread:$0]  %s32, 256, %s1, [#allocation4]
    $region13: #{tpu_custom_call.1} parent=1 // pred_fallthru
      _
    // Predicated region
    $region14: #{tpu_custom_call.1} parent=1 // pred_check
      _
    $region15: #{tpu_custom_call.1} parent=1 // pred_check_branch
      %36 = sbr.rel (0) target = $region17
    $region16: #{tpu_custom_call.1} parent=1 // pred_region
      %37 = dma.done [#allocation4], 256
    $region17: #{tpu_custom_call.1} parent=1 // pred_fallthru
      _
    %38 = vsyncpa [#allocation3], 1
    %39 = vsyncpa [#allocation4], 1

</llo_original>
